<compile_context>
chip_gen: v7x
topology: tpu7x:2x2x1
jax: 0.10.0
libtpu: 0.0.40
codegen_flags: <defaults>
</compile_context>

<pallas_src>
import jax
import jax.numpy as jnp
from jax import lax
from jax.experimental import pallas as pl
from jax.experimental.pallas import tpu as pltpu


def _round_up(x, m):
    return ((x + m - 1) // m) * m


# ---------------------------------------------------------------------------
# Kernels
# ---------------------------------------------------------------------------

def _slr_kernel_fullk(x_ref, w_ref, o_ref):
    """Full-K kernel: one (tm, K) x (tn, K) tile pair -> (tm, tn) output.

    Weight row-norm is fused: sumsq(w_row) is computed with a small
    ones @ w**2 dot (result already lane-dense along tn) and applied as a
    per-column rsqrt scale.  No accumulator scratch, no init/finalize.
    """
    w = w_ref[...]
    acc = lax.dot_general(
        x_ref[...], w,
        dimension_numbers=(((1,), (1,)), ((), ())),
        preferred_element_type=jnp.float32,
    )
    wf = w.astype(jnp.float32)
    ones = jnp.ones((8, w_ref.shape[1]), jnp.float32)
    ssq = lax.dot_general(
        ones, wf * wf,
        dimension_numbers=(((1,), (1,)), ((), ())),
        preferred_element_type=jnp.float32,
    )
    # max(., 1e-24) == PyTorch's eps=1e-12 clamp on the norm; also keeps padded
    # (all-zero) weight rows finite: 0 * rsqrt(1e-24) == 0 (no inf*0 NaNs).
    inv = lax.rsqrt(jnp.maximum(ssq[0:1, :], 1e-24))
    o_ref[...] = (acc * inv).astype(o_ref.dtype)


def _slr_kernel_ktiled(x_ref, w_ref, o_ref, acc_ref, ssq_ref):
    """Fallback for very large K: accumulate matmul + weight sumsq across the
    K grid axis and normalize in the finalize step."""
    k = pl.program_id(2)

    @pl.when(k == 0)
    def _():
        acc_ref[...] = jnp.zeros_like(acc_ref)
        ssq_ref[...] = jnp.zeros_like(ssq_ref)

    w = w_ref[...]
    acc_ref[...] += lax.dot_general(
        x_ref[...], w,
        dimension_numbers=(((1,), (1,)), ((), ())),
        preferred_element_type=jnp.float32,
    )
    wf = w.astype(jnp.float32)
    ones = jnp.ones((8, w_ref.shape[1]), jnp.float32)
    ssq_ref[...] += lax.dot_general(
        ones, wf * wf,
        dimension_numbers=(((1,), (1,)), ((), ())),
        preferred_element_type=jnp.float32,
    )

    @pl.when(k == pl.num_programs(2) - 1)
    def _():
        inv = lax.rsqrt(jnp.maximum(ssq_ref[0:1, :], 1e-24))
        o_ref[...] = (acc_ref[...] * inv).astype(o_ref.dtype)


# ---------------------------------------------------------------------------
# Wrapper
# ---------------------------------------------------------------------------

def prepare_slr_weight(weight, *, use_bf16=False):
    """Pad the (O, K) weight to MXU/lane-aligned shape and cast ONCE, outside
    the per-call hot path (re-padding per forward would cost an extra full
    HBM read+write of the weight)."""
    O, K = weight.shape
    dtype = jnp.bfloat16 if use_bf16 else jnp.float32
    Op = _round_up(O, 256)   # 256-aligned for the v6e/v7x 2x256x256 MXU
    Kp = _round_up(K, 128)
    if (Op, Kp) == (O, K) and weight.dtype == dtype:
        return weight
    return jnp.zeros((Op, Kp), dtype).at[:O, :K].set(weight.astype(dtype))


def _vmem_hard_cap():
    try:
        info = pltpu.get_tpu_info()
        cap = int(getattr(info, "vmem_capacity_bytes", 64 << 20))
    except Exception:
        cap = 64 << 20            # conservative fallback: v7x per-TC VMEM
    # Leave headroom for compiler-internal scratch: <=48 MiB on v7x (64 MiB/TC),
    # <=96 MiB on v5e/v6e (128 MiB).
    return min((cap * 3) // 4, 100 << 20)


def slr_layer_forward(x, weight, bias=None, *, out_features=None,
                      tm=None, tn=None, tk=None, out_dtype=None):
    """SLR_layer forward: x @ normalize(weight, dim=1).T.

    x: (B, K).  weight: either the raw (O, K) parameter or the padded/cast
    output of prepare_slr_weight() (then pass out_features=O).
    The module's r * tanh(bias) term is exactly 0 for finite inputs and is
    dropped (only differs from PyTorch when input row 0 contains inf/NaN).
    """
    del bias  # r == 0 * ||x[0]|| == 0  ->  bias never contributes.
    B, K = x.shape
    Ow, Kw = weight.shape
    O = out_features if out_features is not None else Ow
    assert K <= Kw and O <= Ow

    use_bf16 = weight.dtype == jnp.bfloat16
    in_dtype = weight.dtype
    isz = jnp.dtype(in_dtype).itemsize
    sub = 16 if use_bf16 else 8          # bf16 packs 16 rows per sublane group
    if out_dtype is None:
        out_dtype = x.dtype
    osz = jnp.dtype(out_dtype).itemsize

    hard_cap = _vmem_hard_cap()
    tile_budget = (hard_cap * 17) // 20   # ~85% of the scoped-VMEM cap

    # ---- tile selection ---------------------------------------------------
    if tm is None:
        # Small B: single i step -> the weight streams from HBM exactly once.
        tm = min(512, _round_up(B, sub))
    assert tm % sub == 0, f"tm must be a multiple of {sub} for {in_dtype}"
    Bp = _round_up(B, tm)
    n_i = Bp // tm

    if tn is None:
        if Ow % 512 == 0:
            tn = 512
        elif Ow % 256 == 0:
            tn = 256
        else:
            tn = 256 if Ow > 128 else 128
        # v7x has 2 TensorCores: keep >= 2 parallel (i, j) steps when possible.
        while tn > 128 and n_i * (_round_up(Ow, tn) // tn) < 2:
            tn //= 2
    assert tn % 128 == 0
    Op = _round_up(Ow, tn)

    Kp_min = _round_up(Kw, 128)
    if tk is None:
        fullk_bytes = 2 * (tm + tn) * Kp_min * isz + 2 * tm * tn * osz
        if fullk_bytes <= tile_budget:
            tk = Kp_min                   # full K: no k axis, no accumulator
        else:
            tk = 512
            while (tk * 2 < Kp_min and
                   2 * (tm + tn) * (tk * 2) * isz + 2 * tm * tn * osz
                   + tm * tn * 4 + 8 * tn * 4 <= tile_budget):
                tk *= 2
    assert tk % 128 == 0
    Kp = _round_up(Kw, tk)
    full_k = (Kp == tk)

    # Scoped VMEM limit from the actual double-buffered footprint (+ headroom).
    if full_k:
        footprint = 2 * (tm + tn) * Kp * isz + 2 * tm * tn * osz
    else:
        footprint = (2 * (tm + tn) * tk * isz + 2 * tm * tn * osz
                     + tm * tn * 4 + 8 * tn * 4)
    vmem_limit = int(max(min(footprint + footprint // 2 + (4 << 20), hard_cap),
                         16 << 20))

    # ---- pad / cast operands ------------------------------------------------
    # Activations are per-call data: pad/cast here only if needed.
    if (B, K) != (Bp, Kp) or x.dtype != in_dtype:
        x_p = jnp.zeros((Bp, Kp), in_dtype).at[:B, :K].set(x.astype(in_dtype))
    else:
        x_p = x
    # The weight should have been prepared once via prepare_slr_weight();
    # only re-pad if it was not (costs an extra HBM pass over the weight).
    if (Ow, Kw) != (Op, Kp):
        w_p = jnp.zeros((Op, Kp), in_dtype).at[:Ow, :Kw].set(weight)
    else:
        w_p = weight

    # ---- pallas_call ----------------------------------------------------------
    if full_k:
        out = pl.pallas_call(
            _slr_kernel_fullk,
            out_shape=jax.ShapeDtypeStruct((Bp, Op), out_dtype),
            grid_spec=pltpu.PrefetchScalarGridSpec(
                num_scalar_prefetch=0,
                grid=(Bp // tm, Op // tn),
                in_specs=[
                    pl.BlockSpec((tm, Kp), lambda i, j: (i, 0)),   # x tile
                    pl.BlockSpec((tn, Kp), lambda i, j: (j, 0)),   # weight tile
                ],
                out_specs=pl.BlockSpec((tm, tn), lambda i, j: (i, j)),
            ),
            compiler_params=pltpu.CompilerParams(
                dimension_semantics=("parallel", "parallel"),
                vmem_limit_bytes=vmem_limit,
            ),
        )(x_p, w_p)
    else:
        out = pl.pallas_call(
            _slr_kernel_ktiled,
            out_shape=jax.ShapeDtypeStruct((Bp, Op), out_dtype),
            grid_spec=pltpu.PrefetchScalarGridSpec(
                num_scalar_prefetch=0,
                grid=(Bp // tm, Op // tn, Kp // tk),
                in_specs=[
                    pl.BlockSpec((tm, tk), lambda i, j, k: (i, k)),  # x tile
                    pl.BlockSpec((tn, tk), lambda i, j, k: (j, k)),  # weight tile
                ],
                out_specs=pl.BlockSpec((tm, tn), lambda i, j, k: (i, j)),
                scratch_shapes=[pltpu.VMEM((tm, tn), jnp.float32),   # matmul acc
                                pltpu.VMEM((8, tn), jnp.float32)],   # row sumsq
            ),
            compiler_params=pltpu.CompilerParams(
                dimension_semantics=("parallel", "parallel", "arbitrary"),
                vmem_limit_bytes=vmem_limit,
            ),
        )(x_p, w_p)

    if (Bp, Op) != (B, O):
        out = out[:B, :O]
    return out


def init_slr_params(key, in_features, out_features):
    """Matches the module's __init__: xavier_uniform_ weight, zero bias."""
    bound = (6.0 / (in_features + out_features)) ** 0.5
    weight = jax.random.uniform(
        key, (out_features, in_features), jnp.float32, minval=-bound, maxval=bound
    )
    bias = jnp.zeros((out_features,), jnp.float32)
    return weight, bias


def _reference(x, weight):
    w_n = weight / jnp.maximum(
        jnp.sqrt(jnp.sum(weight * weight, axis=1, keepdims=True)), 1e-12
    )
    return x @ w_n.T


if __name__ == "__main__":
    key = jax.random.PRNGKey(0)
    k_x, k_w, k_x2, k_w2 = jax.random.split(key, 4)

    # --- Small demo shape (matches the original module usage), full-K path ---
    B, K, O = 8, 32, 16
    x = jax.random.normal(k_x, (B, K), jnp.float32)
    weight, bias = init_slr_params(k_w, K, O)
    w_prep = prepare_slr_weight(weight)            # pad/cast once, off the hot path
    out = jax.block_until_ready(
        slr_layer_forward(x, w_prep, bias, out_features=O))
    assert out.shape == (B, O)
    assert jnp.allclose(out, _reference(x, weight), atol=1e-4, rtol=1e-4), \
        "mismatch (small / full-K)"

    # --- Non-aligned shape, explicit tiny tiles -> exercises the 3-D (B,O,K)
    #     accumulator grid with in-kernel row-norm accumulation and O padding.
    B2, K2, O2 = 16, 384, 200
    x2 = jax.random.normal(k_x2, (B2, K2), jnp.float32)
    weight2, bias2 = init_slr_params(k_w2, K2, O2)
    out2 = jax.block_until_ready(
        slr_layer_forward(x2, weight2, bias2, tm=8, tn=128, tk=128))
    assert out2.shape == (B2, O2)
    assert jnp.allclose(out2, _reference(x2, weight2), atol=5e-4, rtol=5e-4), \
        "mismatch (k-tiled)"

    # --- bf16 operands (f32 MXU accumulation), prepared weight, full-K path ---
    w2_bf16 = prepare_slr_weight(weight2, use_bf16=True)
    out3 = jax.block_until_ready(
        slr_layer_forward(x2, w2_bf16, bias2, out_features=O2))
    assert out3.shape == (B2, O2)
    assert jnp.allclose(out3, _reference(x2, weight2), atol=3e-2, rtol=3e-2), \
        "mismatch (bf16)"

    print("KERNEL_OK")
</pallas_src>

<mosaic_0001>
module attributes {stable_mosaic.version = 11 : i64} {
  func.func @_slr_kernel_fullk(%arg0: i32, %arg1: i32, %arg2: memref<8x128xf32, #tpu.memory_space<vmem>>, %arg3: memref<128x128xf32, #tpu.memory_space<vmem>>, %arg4: memref<8x128xf32, #tpu.memory_space<vmem>>) attributes {dimension_semantics = [#tpu.dimension_semantics<parallel>, #tpu.dimension_semantics<parallel>], iteration_bounds = array<i64: 1, 2>, scalar_prefetch = 0 : i64, scratch_operands = 0 : i64, tpu.core_type = #tpu.core_type<tc>, window_params = [{transform_indices = @transform_0, window_bounds = array<i64: 8, 128>}, {transform_indices = @transform_1, window_bounds = array<i64: 128, 128>}, {transform_indices = @transform_2, window_bounds = array<i64: 8, 128>}]} {
    %c0 = arith.constant 0 : index
    %c0_0 = arith.constant 0 : index
    %0 = vector.load %arg3[%c0, %c0_0] : memref<128x128xf32, #tpu.memory_space<vmem>>, vector<128x128xf32>
    %c0_1 = arith.constant 0 : index
    %c0_2 = arith.constant 0 : index
    %1 = vector.load %arg2[%c0_1, %c0_2] : memref<8x128xf32, #tpu.memory_space<vmem>>, vector<8x128xf32>
    %cst = arith.constant dense<0.000000e+00> : vector<8x128xf32>
    %2 = tpu.matmul %1, %0, %cst {dimension_numbers = #tpu.dot_dimension_numbers<[1], [1], [0], [0], [0, 0, 1, 0], [], []>} : vector<8x128xf32>, vector<128x128xf32>, vector<8x128xf32> -> vector<8x128xf32>
    %cst_3 = arith.constant 1.000000e+00 : f32
    %3 = vector.broadcast %cst_3 : f32 to vector<8x128xf32>
    %4 = arith.mulf %0, %0 : vector<128x128xf32>
    %cst_4 = arith.constant dense<0.000000e+00> : vector<8x128xf32>
    %5 = tpu.matmul %3, %4, %cst_4 {dimension_numbers = #tpu.dot_dimension_numbers<[1], [1], [0], [0], [0, 0, 1, 0], [], []>} : vector<8x128xf32>, vector<128x128xf32>, vector<8x128xf32> -> vector<8x128xf32>
    %6 = vector.extract_strided_slice %5 {offsets = [0, 0], sizes = [1, 128], strides = [1, 1]} : vector<8x128xf32> to vector<1x128xf32>
    %cst_5 = arith.constant 1.000000e-24 : f32
    %7 = vector.broadcast %cst_5 : f32 to vector<1x128xf32>
    %8 = arith.maximumf %6, %7 : vector<1x128xf32>
    %9 = math.rsqrt %8 : vector<1x128xf32>
    %10 = vector.broadcast %9 : vector<1x128xf32> to vector<8x128xf32>
    %11 = arith.mulf %2, %10 : vector<8x128xf32>
    %c0_6 = arith.constant 0 : index
    %c0_7 = arith.constant 0 : index
    %12 = vector.load %arg4[%c0_6, %c0_7] : memref<8x128xf32, #tpu.memory_space<vmem>>, vector<8x128xf32>
    tpu.vector_store %arg4[%c0_6, %c0_7], %11 {strides = array<i32>} : memref<8x128xf32, #tpu.memory_space<vmem>>, vector<8x128xf32>,
    return
  }
  func.func @transform_0(%arg0: i32, %arg1: i32) -> (i32, i32) {
    %c0_i32 = arith.constant 0 : i32
    %c0_i32_0 = arith.constant 0 : i32
    return %arg0, %c0_i32 : i32, i32
  }
  func.func @transform_1(%arg0: i32, %arg1: i32) -> (i32, i32) {
    %c0_i32 = arith.constant 0 : i32
    %c0_i32_0 = arith.constant 0 : i32
    return %arg1, %c0_i32 : i32, i32
  }
  func.func @transform_2(%arg0: i32, %arg1: i32) -> (i32, i32) {
    %c0_i32 = arith.constant 0 : i32
    return %arg0, %arg1 : i32, i32
  }
}

</mosaic_0001>

<llo_original>
// kernel: tpu_custom_call.1
$region0: #{tpu_custom_call.1}
  #allocation0 [shape = 'u32[]', space=smem, size = 0x4, offset = 0x4, fixed_abs, tag = 'smem constant byte address 0x4 - core index']
  #allocation1 [shape = 'u32[144,128]{1,0:T(1,128)}', space=vmem, size = 0x12000, scoped, tag = 'internal scratch']
  %s0 = inlined_call_operand.hbm [shape: f32[8,128], index: 0, kind: input, shape index: {}]
  %s1 = inlined_call_operand.hbm [shape: f32[256,128], index: 1, kind: input, shape index: {}]
  %s2 = inlined_call_operand.hbm [shape: f32[8,256], index: 2, kind: output, shape index: {}]
  %s3 = sld [smem:[#allocation0]]
  $region49: #{tpu_custom_call.1} parent=0
    _
  %s5 = ssub.s32 1, %s3
  %s6 = scalar_select 0, %s5, %s3
  $region1: #{tpu_custom_call.1} parent=0
    #allocation2 [shape = 'u8[4096]{0}', space=vmem, size = 0x1000, scoped, tag = 'input window, operand 0, single buffered']
    #allocation3 [shape = 's32[2]{0}', space=sflag, size = 0x8, scoped, tag = 'scoped memory for tpu_custom_call.1']
    #allocation4 [shape = 's32[2]{0}', space=sflag, size = 0x8, scoped, tag = 'scoped memory for tpu_custom_call.1']
    #allocation5 [shape = 'u8[131072]{0}', space=vmem, size = 0x20000, scoped, tag = 'input window, operand 1']
    #allocation6 [shape = 's32[2]{0}', space=sflag, size = 0x8, scoped, tag = 'scoped memory for tpu_custom_call.1']
    #allocation7 [shape = 'u8[8192]{0}', space=vmem, size = 0x2000, scoped, tag = 'output window, operand 0']
    %7 = vsyncpa [#allocation3], 0
    %8 = vsyncpa [#allocation6], 0
    %s9 = scalar_lea.sflag [#allocation6], 1
    %10 = vsyncpa %s9, 0
    %11 = vsyncpa [#allocation4], 0
    %s12 = scalar_lea.sflag [#allocation4], 1
    %13 = vsyncpa %s12, 0
    loop: start=0, step=1, limit=4
    $region2: #{tpu_custom_call.1} parent=1 // loop_pre_header
      _
    $region3: #{tpu_custom_call.1} parent=1 // loop_header
      %s15 = sphi 0, %s19
      %p16 = scmp.ge.s32.totalorder %s15, 4
      %s22 = sphi 0, %s34
      %s23 = sphi 0, %s30
      %s24 = sphi 0, %s22
      %s25 = sphi 0, %s23
      %s26 = sphi 0, %s24
      %s27 = sphi 0, %s25
      %s37 = sphi 0, %s39
      %s40 = sphi 0, %s37
      %s41 = sphi 0, %s40
      %s57 = sphi 0, %s41
      %s63 = sphi 0, %s65
      %s66 = sphi 0, %s63
      %s67 = sphi 0, %s66
      %s83 = sphi 0, %s67
      %s91 = sphi 0, %s93
      %s94 = sphi 0, %s91
      %s95 = sphi 0, %s94
      %s111 = sphi 0, %s95
    $region4: #{tpu_custom_call.1} parent=1 // loop_header_branch
      %18 = sbr.rel (%p16) target = $region8
    $region5: #{tpu_custom_call.1} parent=1 // loop_body
      %s20 = ssub.s32 %s15, 1
      %s21 = ssub.s32 %s15, 2
      %s28 = sadd.s32 1, %s23
      %p29 = scmp.ge.s32.totalorder %s28, 2
      %s30 = scalar_select %p29, 0, %s28
      %s31 = sadd.s32 1, %s22
      %s32 = scalar_select %p29, %s31, %s22
      %p33 = scmp.ge.s32.totalorder %s32, 1
      %s34 = scalar_select %p33, 0, %s32
      %s35 = ssub.s32 %s22, %s34
      %p36 = scmp.eq.s32.totalorder %s35, 0
      %s38 = sadd.s32 %s37, 1
      %s39 = scalar_select %p36, %s37, %s38
      %p42 = pneg %p36
      %p43 = scmp.eq.s32.totalorder %s15, 1
      %p44 = por %p42, %p43
      %p45 = scmp.ne.s32.totalorder %s37, %s40
      %p46 = scmp.eq.s32.totalorder %s15, 0
      %p47 = por %p45, %p46
      %p48 = scmp.ne.s32.totalorder %s37, %s40
      %p49 = scmp.eq.s32.totalorder %s20, 1
      %p50 = por %p48, %p49
      %p51 = scmp.ne.s32.totalorder %s40, %s41
      %p52 = scmp.eq.s32.totalorder %s20, 0
      %p53 = por %p51, %p52
      %p54 = scmp.ne.s32.totalorder %s40, %s41
      %p55 = scmp.eq.s32.totalorder %s21, 1
      %p56 = por %p54, %p55
      %p58 = scmp.ne.s32.totalorder %s41, %s57
      %p59 = scmp.eq.s32.totalorder %s21, 0
      %p60 = por %p58, %p59
      %s61 = ssub.s32 %s23, %s30
      %p62 = scmp.eq.s32.totalorder %s61, 0
      %s64 = sadd.s32 %s63, 1
      %s65 = scalar_select %p62, %s63, %s64
      %p68 = pneg %p62
      %p69 = scmp.eq.s32.totalorder %s15, 1
      %p70 = por %p68, %p69
      %p71 = scmp.ne.s32.totalorder %s63, %s66
      %p72 = scmp.eq.s32.totalorder %s15, 0
      %p73 = por %p71, %p72
      %p74 = scmp.ne.s32.totalorder %s63, %s66
      %p75 = scmp.eq.s32.totalorder %s20, 1
      %p76 = por %p74, %p75
      %p77 = scmp.ne.s32.totalorder %s66, %s67
      %p78 = scmp.eq.s32.totalorder %s20, 0
      %p79 = por %p77, %p78
      %p80 = scmp.ne.s32.totalorder %s66, %s67
      %p81 = scmp.eq.s32.totalorder %s21, 1
      %p82 = por %p80, %p81
      %p84 = scmp.ne.s32.totalorder %s67, %s83
      %p85 = scmp.eq.s32.totalorder %s21, 0
      %p86 = por %p84, %p85
      %s87 = ssub.s32 %s22, %s34
      %s88 = ssub.s32 %s23, %s30
      %s89 = sor.u32 %s87, %s88
      %p90 = scmp.eq.s32.totalorder %s89, 0
      %s92 = sadd.s32 %s91, 1
      %s93 = scalar_select %p90, %s91, %s92
      %p96 = pneg %p90
      %p97 = scmp.eq.s32.totalorder %s15, 1
      %p98 = por %p96, %p97
      %p99 = scmp.ne.s32.totalorder %s91, %s94
      %p100 = scmp.eq.s32.totalorder %s15, 0
      %p101 = por %p99, %p100
      %p102 = scmp.ne.s32.totalorder %s91, %s94
      %p103 = scmp.eq.s32.totalorder %s20, 1
      %p104 = por %p102, %p103
      %p105 = scmp.ne.s32.totalorder %s94, %s95
      %p106 = scmp.eq.s32.totalorder %s20, 0
      %p107 = por %p105, %p106
      %p108 = scmp.ne.s32.totalorder %s94, %s95
      %p109 = scmp.eq.s32.totalorder %s21, 1
      %p110 = por %p108, %p109
      %p112 = scmp.ne.s32.totalorder %s95, %s111
      %p113 = scmp.eq.s32.totalorder %s21, 0
      %p114 = por %p112, %p113
      %p115 = scmp.le.s32.totalorder 1, %s15
      %p116 = scmp.lt.s32.totalorder %s15, 3
      %p117 = pnand %p115, %p116
      %p118 = pneg %p117
      // Predicated region
      $region9: #{tpu_custom_call.1} parent=5 // pred_check
        _
      $region10: #{tpu_custom_call.1} parent=5 // pred_check_branch
        %120 = sbr.rel (%p117) target = $region12
      $region11: #{tpu_custom_call.1} parent=5 // pred_region
        %s121 = ssub.s32 %s15, 1
        // Predicated region
        $region13: #{tpu_custom_call.1} parent=11 // pred_check
          %p122 = pneg %p53
        $region14: #{tpu_custom_call.1} parent=11 // pred_check_branch
          %124 = sbr.rel (%p122) target = $region16
        $region15: #{tpu_custom_call.1} parent=11 // pred_region
          %s126 = ssub.s32 128, 128
          %127 = vsyncadd [#allocation3], %s126
          %s128 = smul.addr %s24, 128
          %s129 = scalar_lea.hbm %s0, %s128
          %s131 = sshll.u32 [#allocation2], 4
          %s132 = int_to_ptr.vmem [resolvable:$true] %s131
          %134 = dma.hbm_to_vmem [thread:$0]  %s129, 128, %s132, [#allocation3]
        $region16: #{tpu_custom_call.1} parent=11 // pred_fallthru
          _
      $region12: #{tpu_custom_call.1} parent=5 // pred_fallthru
        _
      %p135 = scmp.lt.s32.totalorder %s15, 2
      // Predicated region
      $region17: #{tpu_custom_call.1} parent=5 // pred_check
        %p136 = pneg %p135
      $region18: #{tpu_custom_call.1} parent=5 // pred_check_branch
        %138 = sbr.rel (%p136) target = $region20
      $region19: #{tpu_custom_call.1} parent=5 // pred_region
        // Predicated region
        $region21: #{tpu_custom_call.1} parent=19 // pred_check
          %p139 = pneg %p73
        $region22: #{tpu_custom_call.1} parent=19 // pred_check_branch
          %141 = sbr.rel (%p139) target = $region24
        $region23: #{tpu_custom_call.1} parent=19 // pred_region
          %s142 = sand.u32 %s63, 1
          %s143 = scalar_lea.sflag [#allocation6], %s142
          %s144 = sand.u32 %s63, 1
          %s145 = smul.addr %s144, 128
          %s146 = scalar_lea.vmem [#allocation5], %s145
          %s147 = smul.u32 16, %s23
          %s149 = ssub.s32 2048, 2048
          %150 = vsyncadd %s143, %s149
          %s151 = smul.addr %s147, 128
          %s152 = scalar_lea.hbm %s1, %s151
          %s153 = sshll.u32 %s146, 4
          %s154 = int_to_ptr.vmem [resolvable:$true] %s153
          %159 = dma.hbm_to_vmem [thread:$0]  %s152, 2048, %s154, %s143, 128, 128, 8
        $region24: #{tpu_custom_call.1} parent=19 // pred_fallthru
          _
      $region20: #{tpu_custom_call.1} parent=5 // pred_fallthru
        _
      %p160 = scmp.le.s32.totalorder 1, %s15
      %p161 = scmp.lt.s32.totalorder %s15, 3
      %p162 = pnand %p160, %p161
      %p163 = pneg %p162
      // Predicated region
      $region25: #{tpu_custom_call.1} parent=5 // pred_check
        _
      $region26: #{tpu_custom_call.1} parent=5 // pred_check_branch
        %165 = sbr.rel (%p162) target = $region28
      $region27: #{tpu_custom_call.1} parent=5 // pred_region
        %s166 = ssub.s32 %s15, 1
        // Predicated region
        $region29: #{tpu_custom_call.1} parent=27 // pred_check
          %p167 = pneg %p53
        $region30: #{tpu_custom_call.1} parent=27 // pred_check_branch
          %169 = sbr.rel (%p167) target = $region32
        $region31: #{tpu_custom_call.1} parent=27 // pred_region
          %170 = dma.done [#allocation3], 128
        $region32: #{tpu_custom_call.1} parent=27 // pred_fallthru
          _
        %s171 = sand.u32 %s66, 1
        %s172 = scalar_lea.sflag [#allocation6], %s171
        %s173 = sand.u32 %s66, 1
        %s174 = smul.addr %s173, 128
        %s175 = scalar_lea.vmem [#allocation5], %s174
        // Predicated region
        $region33: #{tpu_custom_call.1} parent=27 // pred_check
          %p176 = pneg %p79
        $region34: #{tpu_custom_call.1} parent=27 // pred_check_branch
          %178 = sbr.rel (%p176) target = $region36
        $region35: #{tpu_custom_call.1} parent=27 // pred_region
          %179 = dma.done %s172, 2048
        $region36: #{tpu_custom_call.1} parent=27 // pred_fallthru
          _
        %p180 = pneg %p53
        %p181 = pneg %p50
        %s182 = sand.u32 %s66, 1
        %s183 = scalar_lea.sflag [#allocation6], %s182
        %s184 = sand.u32 %s66, 1
        %s185 = smul.addr %s184, 128
        %s186 = scalar_lea.vmem [#allocation5], %s185
        %p187 = pneg %p79
        %p188 = pneg %p76
        %p189 = pneg %p107
        %p190 = pneg %p104
        %s191 = sand.u32 %s94, 1
        %s192 = scalar_lea.sflag [#allocation4], %s191
        %s193 = sand.u32 %s94, 1
        %s194 = smul.addr %s193, 8
        %s195 = scalar_lea.vmem [#allocation7], %s194
        %s196 = smul.u32 16, %s25
        %v197 = vld [vmem:[%s175] sm:$0xff]
        %v198 = vld [vmem:[%s175 + $0x8] sm:$0xff]
        %v199 = vld [vmem:[%s175 + $0x10] sm:$0xff]
        %v200 = vld [vmem:[%s175 + $0x18] sm:$0xff]
        %v201 = vld [vmem:[%s175 + $0x20] sm:$0xff]
        %v202 = vld [vmem:[%s175 + $0x28] sm:$0xff]
        %v203 = vld [vmem:[%s175 + $0x30] sm:$0xff]
        %v204 = vld [vmem:[%s175 + $0x38] sm:$0xff]
        %v205 = vld [vmem:[%s175 + $0x40] sm:$0xff]
        %v206 = vld [vmem:[%s175 + $0x48] sm:$0xff]
        %v207 = vld [vmem:[%s175 + $0x50] sm:$0xff]
        %v208 = vld [vmem:[%s175 + $0x58] sm:$0xff]
        %v209 = vld [vmem:[%s175 + $0x60] sm:$0xff]
        %v210 = vld [vmem:[%s175 + $0x68] sm:$0xff]
        %v211 = vld [vmem:[%s175 + $0x70] sm:$0xff]
        %v212 = vld [vmem:[%s175 + $0x78] sm:$0xff]
        %v213 = vld [vmem:[#allocation2] sm:$0xff]
        %214 = vmatprep.subr.mxu0 0.0
        %215 = vmatpush1.xpose.msra.mxu0 %v197
        %216 = vmatprep.subr.mxu0 0.0
        %217 = vmatpush1.xpose.msra.mxu0 %v198
        %218 = vmatprep.subr.mxu0 0.0
        %219 = vmatpush1.xpose.msra.mxu0 %v199
        %220 = vmatprep.subr.mxu0 0.0
        %221 = vmatpush1.xpose.msra.mxu0 %v200
        %222 = vmatprep.subr.mxu0 0.0
        %223 = vmatpush1.xpose.msra.mxu0 %v201
        %224 = vmatprep.subr.mxu0 0.0
        %225 = vmatpush1.xpose.msra.mxu0 %v202
        %226 = vmatprep.subr.mxu0 0.0
        %227 = vmatpush1.xpose.msra.mxu0 %v203
        %228 = vmatprep.subr.mxu0 0.0
        %229 = vmatpush1.xpose.msra.mxu0 %v204
        %230 = vmatprep.subr.mxu0 0.0
        %231 = vmatpush1.xpose.msra.mxu0 %v205
        %232 = vmatprep.subr.mxu0 0.0
        %233 = vmatpush1.xpose.msra.mxu0 %v206
        %234 = vmatprep.subr.mxu0 0.0
        %235 = vmatpush1.xpose.msra.mxu0 %v207
        %236 = vmatprep.subr.mxu0 0.0
        %237 = vmatpush1.xpose.msra.mxu0 %v208
        %238 = vmatprep.subr.mxu0 0.0
        %239 = vmatpush1.xpose.msra.mxu0 %v209
        %240 = vmatprep.subr.mxu0 0.0
        %241 = vmatpush1.xpose.msra.mxu0 %v210
        %242 = vmatprep.subr.mxu0 0.0
        %243 = vmatpush1.xpose.msra.mxu0 %v211
        %244 = vmatprep.subr.mxu0 0.0
        %245 = vmatpush1.xpose.msra.mxu0 %v212
        %246 = vmatprep.subr.mxu0 0.0
        %247 = vmatpush1.xpose.msra.mxu0 0.0
        %248 = vmatprep.subr.mxu0 0.0
        %249 = vmatpush1.xpose.msra.mxu0 0.0
        %250 = vmatprep.subr.mxu0 0.0
        %251 = vmatpush1.xpose.msra.mxu0 0.0
        %252 = vmatprep.subr.mxu0 0.0
        %253 = vmatpush1.xpose.msra.mxu0 0.0
        %254 = vmatprep.subr.mxu0 0.0
        %255 = vmatpush1.xpose.msra.mxu0 0.0
        %256 = vmatprep.subr.mxu0 0.0
        %257 = vmatpush1.xpose.msra.mxu0 0.0
        %258 = vmatprep.subr.mxu0 0.0
        %259 = vmatpush1.xpose.msra.mxu0 0.0
        %260 = vmatprep.subr.mxu0 0.0
        %261 = vmatpush1.xpose.msra.mxu0 0.0
        %262 = vmatprep.subr.mxu0 0.0
        %263 = vmatpush1.xpose.msra.mxu0 0.0
        %264 = vmatprep.subr.mxu0 0.0
        %265 = vmatpush1.xpose.msra.mxu0 0.0
        %266 = vmatprep.subr.mxu0 0.0
        %267 = vmatpush1.xpose.msra.mxu0 0.0
        %268 = vmatprep.subr.mxu0 0.0
        %269 = vmatpush1.xpose.msra.mxu0 0.0
        %270 = vmatprep.subr.mxu0 0.0
        %271 = vmatpush1.xpose.msra.mxu0 0.0
        %272 = vmatprep.subr.mxu0 0.0
        %273 = vmatpush1.xpose.msra.mxu0 0.0
        %274 = vmatprep.subr.mxu0 0.0
        %275 = vmatpush1.xpose.msra.mxu0 0.0
        %276 = vmatprep.subr.mxu0 0.0
        %277 = vmatpush1.xpose.msra.mxu0 0.0
        %278 = vmatprep.mubr.f32.mxu0 0.0
        %279 = vmatmul.mubr.f32.gmra.mrb[0].mxu0 %v213
        %v280 = vpop.f32.mrb[0].mxu0
        %v281 = vadd.f32 0.0, %v280
        %v282 = vpop.f32.mrb[0].mxu0
        %283 = vdwg.mxu0
        %v284 = vmul.f32 %v197, %v197
        %v285 = vmul.f32 %v198, %v198
        %v286 = vmul.f32 %v199, %v199
        %v287 = vmul.f32 %v200, %v200
        %v288 = vmul.f32 %v201, %v201
        %v289 = vmul.f32 %v202, %v202
        %v290 = vmul.f32 %v203, %v203
        %v291 = vmul.f32 %v204, %v204
        %v292 = vmul.f32 %v205, %v205
        %v293 = vmul.f32 %v206, %v206
        %v294 = vmul.f32 %v207, %v207
        %v295 = vmul.f32 %v208, %v208
        %v296 = vmul.f32 %v209, %v209
        %v297 = vmul.f32 %v210, %v210
        %v298 = vmul.f32 %v211, %v211
        %v299 = vmul.f32 %v212, %v212
        %300 = vmatprep.subr.mxu0 0.0
        %301 = vmatpush1.xpose.msra.mxu0 %v284
        %302 = vmatprep.subr.mxu0 0.0
        %303 = vmatpush1.xpose.msra.mxu0 %v285
        %304 = vmatprep.subr.mxu0 0.0
        %305 = vmatpush1.xpose.msra.mxu0 %v286
        %306 = vmatprep.subr.mxu0 0.0
        %307 = vmatpush1.xpose.msra.mxu0 %v287
        %308 = vmatprep.subr.mxu0 0.0
        %309 = vmatpush1.xpose.msra.mxu0 %v288
        %310 = vmatprep.subr.mxu0 0.0
        %311 = vmatpush1.xpose.msra.mxu0 %v289
        %312 = vmatprep.subr.mxu0 0.0
        %313 = vmatpush1.xpose.msra.mxu0 %v290
        %314 = vmatprep.subr.mxu0 0.0
        %315 = vmatpush1.xpose.msra.mxu0 %v291
        %316 = vmatprep.subr.mxu0 0.0
        %317 = vmatpush1.xpose.msra.mxu0 %v292
        %318 = vmatprep.subr.mxu0 0.0
        %319 = vmatpush1.xpose.msra.mxu0 %v293
        %320 = vmatprep.subr.mxu0 0.0
        %321 = vmatpush1.xpose.msra.mxu0 %v294
        %322 = vmatprep.subr.mxu0 0.0
        %323 = vmatpush1.xpose.msra.mxu0 %v295
        %324 = vmatprep.subr.mxu0 0.0
        %325 = vmatpush1.xpose.msra.mxu0 %v296
        %326 = vmatprep.subr.mxu0 0.0
        %327 = vmatpush1.xpose.msra.mxu0 %v297
        %328 = vmatprep.subr.mxu0 0.0
        %329 = vmatpush1.xpose.msra.mxu0 %v298
        %330 = vmatprep.subr.mxu0 0.0
        %331 = vmatpush1.xpose.msra.mxu0 %v299
        %332 = vmatprep.subr.mxu0 0.0
        %333 = vmatpush1.xpose.msra.mxu0 0.0
        %334 = vmatprep.subr.mxu0 0.0
        %335 = vmatpush1.xpose.msra.mxu0 0.0
        %336 = vmatprep.subr.mxu0 0.0
        %337 = vmatpush1.xpose.msra.mxu0 0.0
        %338 = vmatprep.subr.mxu0 0.0
        %339 = vmatpush1.xpose.msra.mxu0 0.0
        %340 = vmatprep.subr.mxu0 0.0
        %341 = vmatpush1.xpose.msra.mxu0 0.0
        %342 = vmatprep.subr.mxu0 0.0
        %343 = vmatpush1.xpose.msra.mxu0 0.0
        %344 = vmatprep.subr.mxu0 0.0
        %345 = vmatpush1.xpose.msra.mxu0 0.0
        %346 = vmatprep.subr.mxu0 0.0
        %347 = vmatpush1.xpose.msra.mxu0 0.0
        %348 = vmatprep.subr.mxu0 0.0
        %349 = vmatpush1.xpose.msra.mxu0 0.0
        %350 = vmatprep.subr.mxu0 0.0
        %351 = vmatpush1.xpose.msra.mxu0 0.0
        %352 = vmatprep.subr.mxu0 0.0
        %353 = vmatpush1.xpose.msra.mxu0 0.0
        %354 = vmatprep.subr.mxu0 0.0
        %355 = vmatpush1.xpose.msra.mxu0 0.0
        %356 = vmatprep.subr.mxu0 0.0
        %357 = vmatpush1.xpose.msra.mxu0 0.0
        %358 = vmatprep.subr.mxu0 0.0
        %359 = vmatpush1.xpose.msra.mxu0 0.0
        %360 = vmatprep.subr.mxu0 0.0
        %361 = vmatpush1.xpose.msra.mxu0 0.0
        %362 = vmatprep.subr.mxu0 0.0
        %363 = vmatpush1.xpose.msra.mxu0 0.0
        %364 = vmatprep.mubr.f32.mxu0 0.0
        %365 = vmatmul.mubr.f32.gmra.mrb[0].mxu0 1.0
        %v366 = vpop.f32.mrb[0].mxu0
        %v367 = vadd.f32 0.0, %v366
        %v368 = vpop.f32.mrb[0].mxu0
        %369 = vdwg.mxu0
        %v370 = vmax.f32 %v367, 1e-24
        %v371 = vrsqrt.pop %v370
        %v372 = vlaneseq
        %v373 = vshrl.u32 %v372, 7
        %v374 = vsub.s32 0, %v373
        %v375 = vrot.slane %v371, %v374
        %v376 = vmul.f32 %v281, %v375
        %377 = vst [vmem:[%s195] sm:$0xff] %v376
        %s378 = sand.u32 %s94, 1
        %s379 = scalar_lea.sflag [#allocation4], %s378
        %s380 = sand.u32 %s94, 1
        %s381 = smul.addr %s380, 8
        %s382 = scalar_lea.vmem [#allocation7], %s381
        // Predicated region
        $region37: #{tpu_custom_call.1} parent=27 // pred_check
          %p383 = pneg %p104
        $region38: #{tpu_custom_call.1} parent=27 // pred_check_branch
          %385 = sbr.rel (%p383) target = $region40
        $region39: #{tpu_custom_call.1} parent=27 // pred_region
          %s387 = ssub.s32 128, 128
          %388 = vsyncadd %s379, %s387
          %s389 = smul.addr %s24, 2
          %s390 = sadd.s32 %s25, %s389
          %s391 = smul.addr %s390, 128
          %s392 = scalar_lea.hbm %s2, %s391
          %s394 = sshll.u32 %s382, 4
          %s395 = int_to_ptr.vmem [resolvable:$true] %s394
          %397 = dma.vmem_to_hbm [thread:$0]  %s395, 128, %s392, %s379
        $region40: #{tpu_custom_call.1} parent=27 // pred_fallthru
          _
      $region28: #{tpu_custom_call.1} parent=5 // pred_fallthru
        _
      %p398 = scmp.le.s32.totalorder 2, %s15
      // Predicated region
      $region41: #{tpu_custom_call.1} parent=5 // pred_check
        %p399 = pneg %p398
      $region42: #{tpu_custom_call.1} parent=5 // pred_check_branch
        %401 = sbr.rel (%p399) target = $region44
      $region43: #{tpu_custom_call.1} parent=5 // pred_region
        %s402 = ssub.s32 %s15, 2
        // Predicated region
        $region45: #{tpu_custom_call.1} parent=43 // pred_check
          %p403 = pneg %p110
        $region46: #{tpu_custom_call.1} parent=43 // pred_check_branch
          %405 = sbr.rel (%p403) target = $region48
        $region47: #{tpu_custom_call.1} parent=43 // pred_region
          %s406 = sand.u32 %s95, 1
          %s407 = scalar_lea.sflag [#allocation4], %s406
          %s408 = sand.u32 %s95, 1
          %s409 = smul.addr %s408, 8
          %s410 = scalar_lea.vmem [#allocation7], %s409
          %411 = dma.done %s407, 128
        $region48: #{tpu_custom_call.1} parent=43 // pred_fallthru
          _
      $region44: #{tpu_custom_call.1} parent=5 // pred_fallthru
        _
    $region6: #{tpu_custom_call.1} parent=1 // loop_footer
      %s19 = sadd.s32 1, %s15
    $region7: #{tpu_custom_call.1} parent=1 // loop_footer_branch
      %14 = sbr.rel target = $region3
    $region8: #{tpu_custom_call.1} parent=1 // loop_exit
      _
    %412 = vsyncpa [#allocation3], 1
    %s413 = scalar_lea.sflag [#allocation3], 1
    %414 = vsyncpa %s413, 1
    %415 = vsyncpa [#allocation6], 1
    %s416 = scalar_lea.sflag [#allocation6], 1
    %417 = vsyncpa %s416, 1
    %418 = vsyncpa [#allocation4], 1
    %s419 = scalar_lea.sflag [#allocation4], 1
    %420 = vsyncpa %s419, 1

</llo_original>
